<compile_context>
chip_gen: v6e
topology: v6e:2x2x1
jax: 0.10.0
libtpu: 0.0.40
codegen_flags: <defaults>
</compile_context>

<pallas_src>
import functools

import jax
import jax.numpy as jnp
from jax.experimental import pallas as pl
from jax.experimental.pallas import tpu as pltpu


_LANES = 128   # lane width of a vreg
_SUB = 8       # sublanes per vreg row-group


def _dice_bce_kernel(x_ref, t_ref, out_ref, acc_ref, *,
                     smooth, weights, n_valid, needs_mask):
    """Per-tile body.

    x_ref:   (C, TS, 128) f32 logits, class axis leading.
    t_ref:   (TS, 128)    i32 class ids.
    out_ref: (1,) f32 in SMEM — written on the last grid step only.
    acc_ref: (5, 8, 128) f32 VMEM per-lane partial sums, persistent across grid:
             [0] sum(w_t * ce), [1] sum(w_t), [2] sum(p1*t), [3] sum(p1), [4] sum(t)
    """
    b = pl.program_id(0)
    j = pl.program_id(1)

    @pl.when((b == 0) & (j == 0))
    def _():
        acc_ref[...] = jnp.zeros_like(acc_ref)

    C, TS, L = x_ref.shape
    n_sub = TS // _SUB

    if needs_mask:
        row = jax.lax.broadcasted_iota(jnp.int32, (_SUB, L), 0)
        lane = jax.lax.broadcasted_iota(jnp.int32, (_SUB, L), 1)
        local_idx = row * L + lane            # hoisted out of the chunk loop

    # Local (vreg-resident) accumulators; flushed to VMEM once per tile.
    zero = jnp.zeros((_SUB, L), jnp.float32)
    a_ce, a_w, a_inter, a_p, a_t = zero, zero, zero, zero, zero

    for k in range(n_sub):                    # static, unrolled chunk loop
        rs = pl.ds(k * _SUB, _SUB)
        t_k = t_ref[rs, :]                    # (8,128) i32
        xs = [x_ref[c, rs, :] for c in range(C)]   # C x (8,128) f32

        # Numerically stable softmax pieces — class axis unrolled => pure VPU.
        m = xs[0]
        for c in range(1, C):
            m = jnp.maximum(m, xs[c])

        s = None      # sum_c exp(z_c)
        zt = None     # z[target]   (one-hot gather via select chain)
        wt = None     # per-point class weight (only when weights given)
        e1 = None     # exp(z_1) — reused for the class-1 probability
        for c in range(C):
            zc = xs[c] - m
            ec = jnp.exp(zc)
            s = ec if s is None else s + ec
            if c == 1:
                e1 = ec
            mc = (t_k == c).astype(jnp.float32)
            zt = zc * mc if zt is None else zt + zc * mc
            if weights is not None:
                wc = weights[c] * mc
                wt = wc if wt is None else wt + wc

        ce = jnp.log(s) - zt                  # per-point cross entropy
        p1 = e1 / s                           # softmax prob of class 1 (exp reused)
        tf = t_k.astype(jnp.float32)

        if needs_mask:
            base = (j * TS + k * _SUB) * L
            maskf = (base + local_idx < n_valid).astype(jnp.float32)

        # --- CE partial sums -------------------------------------------------
        if weights is None:
            if needs_mask:
                a_ce = a_ce + maskf * ce
                a_w = a_w + maskf
            else:
                a_ce = a_ce + ce
                a_w = a_w + 1.0
        else:
            if needs_mask:
                wt = wt * maskf
            a_ce = a_ce + wt * ce
            a_w = a_w + wt

        # --- Dice partial sums ----------------------------------------------
        if needs_mask:
            a_inter = a_inter + maskf * (p1 * tf)
            a_p = a_p + maskf * p1
            a_t = a_t + maskf * tf
        else:
            a_inter = a_inter + p1 * tf
            a_p = a_p + p1
            a_t = a_t + tf

    # Single VMEM read-modify-write per tile.
    acc_ref[0] += a_ce
    acc_ref[1] += a_w
    acc_ref[2] += a_inter
    acc_ref[3] += a_p
    acc_ref[4] += a_t

    # --- finalize on the last grid step --------------------------------------
    @pl.when((b == pl.num_programs(0) - 1) & (j == pl.num_programs(1) - 1))
    def _():
        s_ce = jnp.sum(acc_ref[0])
        s_w = jnp.sum(acc_ref[1])
        s_i = jnp.sum(acc_ref[2])
        s_p = jnp.sum(acc_ref[3])
        s_t = jnp.sum(acc_ref[4])
        bce = s_ce / s_w
        dice = 1.0 - (2.0 * s_i + smooth) / (s_p + s_t + smooth)
        out_ref[0] = bce + dice


def dice_bce_loss(inputs, targets, weights=None, smooth=1.0, tile_points=8192):
    """Pallas implementation of DiceBCELoss.forward.

    inputs:  (B, C, N) float logits (class axis on dim 1, as in the module)
    targets: (B, N)    int class ids in [0, C)
    weights: optional length-C Python sequence of class weights (static, as in
             the module's constructor)
    tile_points: points processed per grid step (lane-dense; sweep 2048-32768)
    """
    B, C, N = inputs.shape
    assert C >= 2, "Dice term uses softmax probability of class 1 -> need C >= 2"
    if weights is not None:
        weights = tuple(float(w) for w in weights)
        assert len(weights) == C

    L = _LANES
    nt = -(-N // L)                       # rows of 128 points
    nt8 = -(-nt // _SUB) * _SUB           # rounded up to a full vreg row-group
    ts = max(_SUB, (tile_points // L) // _SUB * _SUB)
    ts = min(ts, nt8)                     # rows per tile (multiple of 8)
    nt_pad = -(-nt // ts) * ts
    n_pad = nt_pad * L

    x = inputs.astype(jnp.float32)
    t = targets.astype(jnp.int32)
    if n_pad != N:
        x = jnp.pad(x, ((0, 0), (0, 0), (0, n_pad - N)))
        t = jnp.pad(t, ((0, 0), (0, n_pad - N)))
    x4 = x.reshape(B, C, nt_pad, L)       # lane-dense point layout (free view)
    t3 = t.reshape(B, nt_pad, L)

    kernel = functools.partial(
        _dice_bce_kernel,
        smooth=float(smooth),
        weights=weights,
        n_valid=int(N),
        needs_mask=(n_pad != N),
    )

    out = pl.pallas_call(
        kernel,
        out_shape=jax.ShapeDtypeStruct((1,), jnp.float32),
        grid_spec=pltpu.PrefetchScalarGridSpec(
            num_scalar_prefetch=0,
            grid=(B, nt_pad // ts),
            in_specs=[
                pl.BlockSpec((None, C, ts, L), lambda b, j: (b, 0, j, 0)),  # logits
                pl.BlockSpec((None, ts, L), lambda b, j: (b, j, 0)),        # targets
            ],
            out_specs=pl.BlockSpec(memory_space=pltpu.MemorySpace.SMEM),
            scratch_shapes=[pltpu.VMEM((5, _SUB, L), jnp.float32)],
        ),
        compiler_params=pltpu.CompilerParams(
            dimension_semantics=("arbitrary", "arbitrary")),
    )(x4, t3)
    return out[0]


def dice_bce_loss_ref(inputs, targets, weights=None, smooth=1.0):
    """Pure-JAX reference matching the PyTorch semantics."""
    B, C, N = inputs.shape
    logits = jnp.transpose(inputs, (0, 2, 1)).reshape(-1, C)
    tg = targets.reshape(-1).astype(jnp.int32)
    logp = jax.nn.log_softmax(logits.astype(jnp.float32), axis=-1)
    ce = -jnp.take_along_axis(logp, tg[:, None], axis=-1)[:, 0]
    if weights is None:
        bce = ce.mean()
    else:
        wv = jnp.asarray(weights, jnp.float32)[tg]
        bce = (wv * ce).sum() / wv.sum()
    p1 = jax.nn.softmax(inputs.astype(jnp.float32), axis=1)[:, 1, :].reshape(-1)
    tf = tg.astype(jnp.float32)
    inter = (p1 * tf).sum()
    dice = 1.0 - (2.0 * inter + smooth) / (p1.sum() + tf.sum() + smooth)
    return bce + dice


if __name__ == "__main__":
    key = jax.random.PRNGKey(0)
    k1, k2, k3, k4 = jax.random.split(key, 4)

    # Small shapes consistent with the module: (B, C, N) logits, (B, N) labels.
    B, C, N = 2, 4, 256
    inputs = jax.random.normal(k1, (B, C, N), dtype=jnp.float32)
    targets = jax.random.randint(k2, (B, N), 0, C, dtype=jnp.int32)

    # Default module construction (weights=None, unweighted CrossEntropyLoss).
    loss = dice_bce_loss(inputs, targets, weights=None, smooth=1.0)
    jax.block_until_ready(loss)
    ref = dice_bce_loss_ref(inputs, targets, weights=None, smooth=1.0)
    assert jnp.allclose(loss, ref, rtol=2e-5, atol=2e-5), (loss, ref)

    # Weighted variant (static constructor weights).
    wts = [1.0, 2.0, 0.5, 1.5]
    loss_w = dice_bce_loss(inputs, targets, weights=wts, smooth=1.0)
    jax.block_until_ready(loss_w)
    ref_w = dice_bce_loss_ref(inputs, targets, weights=wts, smooth=1.0)
    assert jnp.allclose(loss_w, ref_w, rtol=2e-5, atol=2e-5), (loss_w, ref_w)

    # Ragged N (exercises padding + in-kernel masking).
    Nr = 200
    inputs_r = jax.random.normal(k3, (B, C, Nr), dtype=jnp.float32)
    targets_r = jax.random.randint(k4, (B, Nr), 0, C, dtype=jnp.int32)
    loss_r = dice_bce_loss(inputs_r, targets_r, weights=None, smooth=1.0)
    jax.block_until_ready(loss_r)
    ref_r = dice_bce_loss_ref(inputs_r, targets_r, weights=None, smooth=1.0)
    assert jnp.allclose(loss_r, ref_r, rtol=2e-5, atol=2e-5), (loss_r, ref_r)

    print("KERNEL_OK")
</pallas_src>

<mosaic_0001>
module attributes {stable_mosaic.version = 11 : i64} {
  func.func @_dice_bce_kernel(%arg0: i32, %arg1: i32, %arg2: memref<1x4x8x128xf32, #tpu.memory_space<vmem>>, %arg3: memref<1x8x128xi32, #tpu.memory_space<vmem>>, %arg4: memref<1xf32, #tpu.memory_space<smem>>, %arg5: memref<5x8x128xf32, #tpu.memory_space<vmem>>) attributes {dimension_semantics = [#tpu.dimension_semantics<arbitrary>, #tpu.dimension_semantics<arbitrary>], iteration_bounds = array<i64: 2, 1>, scalar_prefetch = 0 : i64, scratch_operands = 1 : i64, tpu.core_type = #tpu.core_type<tc>, window_params = [{transform_indices = @transform_0, window_bounds = array<i64: 1, 4, 8, 128>}, {transform_indices = @transform_1, window_bounds = array<i64: 1, 8, 128>}, {transform_indices = @transform_2, window_bounds = array<i64: 1>}]} {
    %c0_i32 = arith.constant 0 : i32
    %0 = arith.cmpi eq, %arg0, %c0_i32 : i32
    %c0_i32_0 = arith.constant 0 : i32
    %1 = arith.cmpi eq, %arg1, %c0_i32_0 : i32
    %2 = arith.andi %0, %1 : i1
    %3 = arith.extui %2 : i1 to i32
    %c0_i32_1 = arith.constant 0 : i32
    %4 = arith.cmpi ne, %3, %c0_i32_1 : i32
    scf.if %4 {
      %cst_52 = arith.constant 0.000000e+00 : f32
      %116 = vector.broadcast %cst_52 : f32 to vector<5x8x128xf32>
      %c0_53 = arith.constant 0 : index
      %c0_54 = arith.constant 0 : index
      %c0_55 = arith.constant 0 : index
      %117 = vector.load %arg5[%c0_53, %c0_54, %c0_55] : memref<5x8x128xf32, #tpu.memory_space<vmem>>, vector<5x8x128xf32>
      tpu.vector_store %arg5[%c0_53, %c0_54, %c0_55], %116 {strides = array<i32>} : memref<5x8x128xf32, #tpu.memory_space<vmem>>, vector<5x8x128xf32>,
    } else {
    }
    %5 = tpu.iota {dimensions = array<i32: 0>} : vector<8x128xi32>
    %6 = tpu.iota {dimensions = array<i32: 1>} : vector<8x128xi32>
    %c128_i32 = arith.constant 128 : i32
    %7 = vector.broadcast %c128_i32 : i32 to vector<8x128xi32>
    %8 = arith.muli %5, %7 : vector<8x128xi32>
    %9 = arith.addi %8, %6 : vector<8x128xi32>
    %cst = arith.constant 0.000000e+00 : f32
    %10 = vector.broadcast %cst : f32 to vector<8x128xf32>
    %c0 = arith.constant 0 : index
    %c0_2 = arith.constant 0 : index
    %c0_3 = arith.constant 0 : index
    %11 = vector.load %arg3[%c0, %c0_2, %c0_3] : memref<1x8x128xi32, #tpu.memory_space<vmem>>, vector<1x8x128xi32>
    %12 = vector.shape_cast %11 : vector<1x8x128xi32> to vector<8x128xi32>
    %c0_4 = arith.constant 0 : index
    %c0_5 = arith.constant 0 : index
    %c0_6 = arith.constant 0 : index
    %c0_7 = arith.constant 0 : index
    %13 = vector.load %arg2[%c0_4, %c0_5, %c0_6, %c0_7] : memref<1x4x8x128xf32, #tpu.memory_space<vmem>>, vector<1x1x8x128xf32>
    %14 = vector.shape_cast %13 : vector<1x1x8x128xf32> to vector<8x128xf32>
    %c0_8 = arith.constant 0 : index
    %c1 = arith.constant 1 : index
    %c0_9 = arith.constant 0 : index
    %c0_10 = arith.constant 0 : index
    %15 = vector.load %arg2[%c0_8, %c1, %c0_9, %c0_10] : memref<1x4x8x128xf32, #tpu.memory_space<vmem>>, vector<1x1x8x128xf32>
    %16 = vector.shape_cast %15 : vector<1x1x8x128xf32> to vector<8x128xf32>
    %c0_11 = arith.constant 0 : index
    %c2 = arith.constant 2 : index
    %c0_12 = arith.constant 0 : index
    %c0_13 = arith.constant 0 : index
    %17 = vector.load %arg2[%c0_11, %c2, %c0_12, %c0_13] : memref<1x4x8x128xf32, #tpu.memory_space<vmem>>, vector<1x1x8x128xf32>
    %18 = vector.shape_cast %17 : vector<1x1x8x128xf32> to vector<8x128xf32>
    %c0_14 = arith.constant 0 : index
    %c3 = arith.constant 3 : index
    %c0_15 = arith.constant 0 : index
    %c0_16 = arith.constant 0 : index
    %19 = vector.load %arg2[%c0_14, %c3, %c0_15, %c0_16] : memref<1x4x8x128xf32, #tpu.memory_space<vmem>>, vector<1x1x8x128xf32>
    %20 = vector.shape_cast %19 : vector<1x1x8x128xf32> to vector<8x128xf32>
    %21 = arith.maximumf %14, %16 : vector<8x128xf32>
    %22 = arith.maximumf %21, %18 : vector<8x128xf32>
    %23 = arith.maximumf %22, %20 : vector<8x128xf32>
    %24 = arith.subf %14, %23 : vector<8x128xf32>
    %25 = math.exp %24 : vector<8x128xf32>
    %c0_i32_17 = arith.constant 0 : i32
    %26 = vector.broadcast %c0_i32_17 : i32 to vector<8x128xi32>
    %27 = arith.cmpi eq, %12, %26 : vector<8x128xi32>
    %28 = arith.extui %27 : vector<8x128xi1> to vector<8x128xi32>
    %29 = arith.sitofp %28 : vector<8x128xi32> to vector<8x128xf32>
    %30 = arith.mulf %24, %29 : vector<8x128xf32>
    %31 = arith.subf %16, %23 : vector<8x128xf32>
    %32 = math.exp %31 : vector<8x128xf32>
    %33 = arith.addf %25, %32 : vector<8x128xf32>
    %c1_i32 = arith.constant 1 : i32
    %34 = vector.broadcast %c1_i32 : i32 to vector<8x128xi32>
    %35 = arith.cmpi eq, %12, %34 : vector<8x128xi32>
    %36 = arith.extui %35 : vector<8x128xi1> to vector<8x128xi32>
    %37 = arith.sitofp %36 : vector<8x128xi32> to vector<8x128xf32>
    %38 = arith.mulf %31, %37 : vector<8x128xf32>
    %39 = arith.addf %30, %38 : vector<8x128xf32>
    %40 = arith.subf %18, %23 : vector<8x128xf32>
    %41 = math.exp %40 : vector<8x128xf32>
    %42 = arith.addf %33, %41 : vector<8x128xf32>
    %c2_i32 = arith.constant 2 : i32
    %43 = vector.broadcast %c2_i32 : i32 to vector<8x128xi32>
    %44 = arith.cmpi eq, %12, %43 : vector<8x128xi32>
    %45 = arith.extui %44 : vector<8x128xi1> to vector<8x128xi32>
    %46 = arith.sitofp %45 : vector<8x128xi32> to vector<8x128xf32>
    %47 = arith.mulf %40, %46 : vector<8x128xf32>
    %48 = arith.addf %39, %47 : vector<8x128xf32>
    %49 = arith.subf %20, %23 : vector<8x128xf32>
    %50 = math.exp %49 : vector<8x128xf32>
    %51 = arith.addf %42, %50 : vector<8x128xf32>
    %c3_i32 = arith.constant 3 : i32
    %52 = vector.broadcast %c3_i32 : i32 to vector<8x128xi32>
    %53 = arith.cmpi eq, %12, %52 : vector<8x128xi32>
    %54 = arith.extui %53 : vector<8x128xi1> to vector<8x128xi32>
    %55 = arith.sitofp %54 : vector<8x128xi32> to vector<8x128xf32>
    %56 = arith.mulf %49, %55 : vector<8x128xf32>
    %57 = arith.addf %48, %56 : vector<8x128xf32>
    %58 = math.log %51 : vector<8x128xf32>
    %59 = arith.subf %58, %57 : vector<8x128xf32>
    %60 = arith.divf %32, %51 : vector<8x128xf32>
    %61 = arith.sitofp %12 : vector<8x128xi32> to vector<8x128xf32>
    %c8_i32 = arith.constant 8 : i32
    %62 = arith.muli %arg1, %c8_i32 : i32
    %c0_i32_18 = arith.constant 0 : i32
    %63 = arith.addi %62, %c0_i32_18 : i32
    %c128_i32_19 = arith.constant 128 : i32
    %64 = arith.muli %63, %c128_i32_19 : i32
    %65 = vector.broadcast %64 : i32 to vector<8x128xi32>
    %66 = arith.addi %65, %9 : vector<8x128xi32>
    %c256_i32 = arith.constant 256 : i32
    %67 = vector.broadcast %c256_i32 : i32 to vector<8x128xi32>
    %68 = arith.cmpi slt, %66, %67 : vector<8x128xi32>
    %69 = arith.extui %68 : vector<8x128xi1> to vector<8x128xi32>
    %70 = arith.sitofp %69 : vector<8x128xi32> to vector<8x128xf32>
    %71 = arith.mulf %70, %59 : vector<8x128xf32>
    %72 = arith.addf %10, %71 : vector<8x128xf32>
    %73 = arith.addf %10, %70 : vector<8x128xf32>
    %74 = arith.mulf %60, %61 : vector<8x128xf32>
    %75 = arith.mulf %70, %74 : vector<8x128xf32>
    %76 = arith.addf %10, %75 : vector<8x128xf32>
    %77 = arith.mulf %70, %60 : vector<8x128xf32>
    %78 = arith.addf %10, %77 : vector<8x128xf32>
    %79 = arith.mulf %70, %61 : vector<8x128xf32>
    %80 = arith.addf %10, %79 : vector<8x128xf32>
    %c0_20 = arith.constant 0 : index
    %c0_21 = arith.constant 0 : index
    %c0_22 = arith.constant 0 : index
    %81 = vector.load %arg5[%c0_20, %c0_21, %c0_22] : memref<5x8x128xf32, #tpu.memory_space<vmem>>, vector<1x8x128xf32>
    %82 = vector.shape_cast %81 : vector<1x8x128xf32> to vector<8x128xf32>
    %83 = arith.addf %82, %72 : vector<8x128xf32>
    %c0_23 = arith.constant 0 : index
    %c0_24 = arith.constant 0 : index
    %c0_25 = arith.constant 0 : index
    %84 = vector.load %arg5[%c0_23, %c0_24, %c0_25] : memref<5x8x128xf32, #tpu.memory_space<vmem>>, vector<1x8x128xf32>
    %85 = vector.shape_cast %84 : vector<1x8x128xf32> to vector<8x128xf32>
    %86 = vector.shape_cast %83 : vector<8x128xf32> to vector<1x8x128xf32>
    tpu.vector_store %arg5[%c0_23, %c0_24, %c0_25], %86 {strides = array<i32>} : memref<5x8x128xf32, #tpu.memory_space<vmem>>, vector<1x8x128xf32>,
    %c1_26 = arith.constant 1 : index
    %c0_27 = arith.constant 0 : index
    %c0_28 = arith.constant 0 : index
    %87 = vector.load %arg5[%c1_26, %c0_27, %c0_28] : memref<5x8x128xf32, #tpu.memory_space<vmem>>, vector<1x8x128xf32>
    %88 = vector.shape_cast %87 : vector<1x8x128xf32> to vector<8x128xf32>
    %89 = arith.addf %88, %73 : vector<8x128xf32>
    %c1_29 = arith.constant 1 : index
    %c0_30 = arith.constant 0 : index
    %c0_31 = arith.constant 0 : index
    %90 = vector.load %arg5[%c1_29, %c0_30, %c0_31] : memref<5x8x128xf32, #tpu.memory_space<vmem>>, vector<1x8x128xf32>
    %91 = vector.shape_cast %90 : vector<1x8x128xf32> to vector<8x128xf32>
    %92 = vector.shape_cast %89 : vector<8x128xf32> to vector<1x8x128xf32>
    tpu.vector_store %arg5[%c1_29, %c0_30, %c0_31], %92 {strides = array<i32>} : memref<5x8x128xf32, #tpu.memory_space<vmem>>, vector<1x8x128xf32>,
    %c2_32 = arith.constant 2 : index
    %c0_33 = arith.constant 0 : index
    %c0_34 = arith.constant 0 : index
    %93 = vector.load %arg5[%c2_32, %c0_33, %c0_34] : memref<5x8x128xf32, #tpu.memory_space<vmem>>, vector<1x8x128xf32>
    %94 = vector.shape_cast %93 : vector<1x8x128xf32> to vector<8x128xf32>
    %95 = arith.addf %94, %76 : vector<8x128xf32>
    %c2_35 = arith.constant 2 : index
    %c0_36 = arith.constant 0 : index
    %c0_37 = arith.constant 0 : index
    %96 = vector.load %arg5[%c2_35, %c0_36, %c0_37] : memref<5x8x128xf32, #tpu.memory_space<vmem>>, vector<1x8x128xf32>
    %97 = vector.shape_cast %96 : vector<1x8x128xf32> to vector<8x128xf32>
    %98 = vector.shape_cast %95 : vector<8x128xf32> to vector<1x8x128xf32>
    tpu.vector_store %arg5[%c2_35, %c0_36, %c0_37], %98 {strides = array<i32>} : memref<5x8x128xf32, #tpu.memory_space<vmem>>, vector<1x8x128xf32>,
    %c3_38 = arith.constant 3 : index
    %c0_39 = arith.constant 0 : index
    %c0_40 = arith.constant 0 : index
    %99 = vector.load %arg5[%c3_38, %c0_39, %c0_40] : memref<5x8x128xf32, #tpu.memory_space<vmem>>, vector<1x8x128xf32>
    %100 = vector.shape_cast %99 : vector<1x8x128xf32> to vector<8x128xf32>
    %101 = arith.addf %100, %78 : vector<8x128xf32>
    %c3_41 = arith.constant 3 : index
    %c0_42 = arith.constant 0 : index
    %c0_43 = arith.constant 0 : index
    %102 = vector.load %arg5[%c3_41, %c0_42, %c0_43] : memref<5x8x128xf32, #tpu.memory_space<vmem>>, vector<1x8x128xf32>
    %103 = vector.shape_cast %102 : vector<1x8x128xf32> to vector<8x128xf32>
    %104 = vector.shape_cast %101 : vector<8x128xf32> to vector<1x8x128xf32>
    tpu.vector_store %arg5[%c3_41, %c0_42, %c0_43], %104 {strides = array<i32>} : memref<5x8x128xf32, #tpu.memory_space<vmem>>, vector<1x8x128xf32>,
    %c4 = arith.constant 4 : index
    %c0_44 = arith.constant 0 : index
    %c0_45 = arith.constant 0 : index
    %105 = vector.load %arg5[%c4, %c0_44, %c0_45] : memref<5x8x128xf32, #tpu.memory_space<vmem>>, vector<1x8x128xf32>
    %106 = vector.shape_cast %105 : vector<1x8x128xf32> to vector<8x128xf32>
    %107 = arith.addf %106, %80 : vector<8x128xf32>
    %c4_46 = arith.constant 4 : index
    %c0_47 = arith.constant 0 : index
    %c0_48 = arith.constant 0 : index
    %108 = vector.load %arg5[%c4_46, %c0_47, %c0_48] : memref<5x8x128xf32, #tpu.memory_space<vmem>>, vector<1x8x128xf32>
    %109 = vector.shape_cast %108 : vector<1x8x128xf32> to vector<8x128xf32>
    %110 = vector.shape_cast %107 : vector<8x128xf32> to vector<1x8x128xf32>
    tpu.vector_store %arg5[%c4_46, %c0_47, %c0_48], %110 {strides = array<i32>} : memref<5x8x128xf32, #tpu.memory_space<vmem>>, vector<1x8x128xf32>,
    %c1_i32_49 = arith.constant 1 : i32
    %111 = arith.cmpi eq, %arg0, %c1_i32_49 : i32
    %c0_i32_50 = arith.constant 0 : i32
    %112 = arith.cmpi eq, %arg1, %c0_i32_50 : i32
    %113 = arith.andi %111, %112 : i1
    %114 = arith.extui %113 : i1 to i32
    %c0_i32_51 = arith.constant 0 : i32
    %115 = arith.cmpi ne, %114, %c0_i32_51 : i32
    scf.if %115 {
      %c0_52 = arith.constant 0 : index
      %c0_53 = arith.constant 0 : index
      %c0_54 = arith.constant 0 : index
      %116 = vector.load %arg5[%c0_52, %c0_53, %c0_54] : memref<5x8x128xf32, #tpu.memory_space<vmem>>, vector<1x8x128xf32>
      %117 = vector.shape_cast %116 : vector<1x8x128xf32> to vector<8x128xf32>
      %118 = vector.shape_cast %117 : vector<8x128xf32> to vector<1x8x128xf32>
      %cst_55 = arith.constant dense<0.000000e+00> : vector<1xf32>
      %119 = vector.multi_reduction <add>, %118, %cst_55 [1, 2] : vector<1x8x128xf32> to vector<1xf32>
      %120 = vector.shape_cast %119 : vector<1xf32> to vector<1x1x1xf32>
      %121 = vector.extract %120[0, 0, 0] : f32 from vector<1x1x1xf32>
      %c1_56 = arith.constant 1 : index
      %c0_57 = arith.constant 0 : index
      %c0_58 = arith.constant 0 : index
      %122 = vector.load %arg5[%c1_56, %c0_57, %c0_58] : memref<5x8x128xf32, #tpu.memory_space<vmem>>, vector<1x8x128xf32>
      %123 = vector.shape_cast %122 : vector<1x8x128xf32> to vector<8x128xf32>
      %124 = vector.shape_cast %123 : vector<8x128xf32> to vector<1x8x128xf32>
      %cst_59 = arith.constant dense<0.000000e+00> : vector<1xf32>
      %125 = vector.multi_reduction <add>, %124, %cst_59 [1, 2] : vector<1x8x128xf32> to vector<1xf32>
      %126 = vector.shape_cast %125 : vector<1xf32> to vector<1x1x1xf32>
      %127 = vector.extract %126[0, 0, 0] : f32 from vector<1x1x1xf32>
      %c2_60 = arith.constant 2 : index
      %c0_61 = arith.constant 0 : index
      %c0_62 = arith.constant 0 : index
      %128 = vector.load %arg5[%c2_60, %c0_61, %c0_62] : memref<5x8x128xf32, #tpu.memory_space<vmem>>, vector<1x8x128xf32>
      %129 = vector.shape_cast %128 : vector<1x8x128xf32> to vector<8x128xf32>
      %130 = vector.shape_cast %129 : vector<8x128xf32> to vector<1x8x128xf32>
      %cst_63 = arith.constant dense<0.000000e+00> : vector<1xf32>
      %131 = vector.multi_reduction <add>, %130, %cst_63 [1, 2] : vector<1x8x128xf32> to vector<1xf32>
      %132 = vector.shape_cast %131 : vector<1xf32> to vector<1x1x1xf32>
      %133 = vector.extract %132[0, 0, 0] : f32 from vector<1x1x1xf32>
      %c3_64 = arith.constant 3 : index
      %c0_65 = arith.constant 0 : index
      %c0_66 = arith.constant 0 : index
      %134 = vector.load %arg5[%c3_64, %c0_65, %c0_66] : memref<5x8x128xf32, #tpu.memory_space<vmem>>, vector<1x8x128xf32>
      %135 = vector.shape_cast %134 : vector<1x8x128xf32> to vector<8x128xf32>
      %136 = vector.shape_cast %135 : vector<8x128xf32> to vector<1x8x128xf32>
      %cst_67 = arith.constant dense<0.000000e+00> : vector<1xf32>
      %137 = vector.multi_reduction <add>, %136, %cst_67 [1, 2] : vector<1x8x128xf32> to vector<1xf32>
      %138 = vector.shape_cast %137 : vector<1xf32> to vector<1x1x1xf32>
      %139 = vector.extract %138[0, 0, 0] : f32 from vector<1x1x1xf32>
      %c4_68 = arith.constant 4 : index
      %c0_69 = arith.constant 0 : index
      %c0_70 = arith.constant 0 : index
      %140 = vector.load %arg5[%c4_68, %c0_69, %c0_70] : memref<5x8x128xf32, #tpu.memory_space<vmem>>, vector<1x8x128xf32>
      %141 = vector.shape_cast %140 : vector<1x8x128xf32> to vector<8x128xf32>
      %142 = vector.shape_cast %141 : vector<8x128xf32> to vector<1x8x128xf32>
      %cst_71 = arith.constant dense<0.000000e+00> : vector<1xf32>
      %143 = vector.multi_reduction <add>, %142, %cst_71 [1, 2] : vector<1x8x128xf32> to vector<1xf32>
      %144 = vector.shape_cast %143 : vector<1xf32> to vector<1x1x1xf32>
      %145 = vector.extract %144[0, 0, 0] : f32 from vector<1x1x1xf32>
      %146 = arith.divf %121, %127 : f32
      %cst_72 = arith.constant 2.000000e+00 : f32
      %147 = arith.mulf %cst_72, %133 : f32
      %cst_73 = arith.constant 1.000000e+00 : f32
      %148 = arith.addf %147, %cst_73 : f32
      %149 = arith.addf %139, %145 : f32
      %cst_74 = arith.constant 1.000000e+00 : f32
      %150 = arith.addf %149, %cst_74 : f32
      %151 = arith.divf %148, %150 : f32
      %cst_75 = arith.constant 1.000000e+00 : f32
      %152 = arith.subf %cst_75, %151 : f32
      %153 = arith.addf %146, %152 : f32
      %c0_76 = arith.constant 0 : index
      %154 = memref.load %arg4[%c0_76] : memref<1xf32, #tpu.memory_space<smem>>
      memref.store %153, %arg4[%c0_76] : memref<1xf32, #tpu.memory_space<smem>>
    } else {
    }
    return
  }
  func.func @transform_0(%arg0: i32, %arg1: i32) -> (i32, i32, i32, i32) {
    %c0_i32 = arith.constant 0 : i32
    %c0_i32_0 = arith.constant 0 : i32
    %c0_i32_1 = arith.constant 0 : i32
    return %arg0, %c0_i32, %arg1, %c0_i32_0 : i32, i32, i32, i32
  }
  func.func @transform_1(%arg0: i32, %arg1: i32) -> (i32, i32, i32) {
    %c0_i32 = arith.constant 0 : i32
    %c0_i32_0 = arith.constant 0 : i32
    return %arg0, %arg1, %c0_i32 : i32, i32, i32
  }
  func.func @transform_2(%arg0: i32, %arg1: i32) -> i32 {
    %c0_i32 = arith.constant 0 : i32
    %c0_i32_0 = arith.constant 0 : i32
    return %c0_i32 : i32
  }
}

</mosaic_0001>

<llo_original>
// kernel: tpu_custom_call.1
$region0: #{tpu_custom_call.1}
  #allocation0 [shape = 'u32[]', space=smem, size = 0x4, offset = 0x4, fixed_abs, tag = 'smem constant byte address 0x4 - core index']
  #allocation1 [shape = 'u32[144,128]{1,0:T(1,128)}', space=vmem, size = 0x12000, scoped, tag = 'internal scratch']
  #allocation2 [shape = 'f32[5,8,128]{2,1,0:T(8,128)}', space=vmem, size = 0x5000, scoped, tag = 'scratch operand']
  %s0 = inlined_call_operand.hbm [shape: f32[2,4,8,128], index: 0, kind: input, shape index: {}]
  %s1 = inlined_call_operand.hbm [shape: s32[2,8,128], index: 1, kind: input, shape index: {}]
  %s2 = inlined_call_operand.hbm [shape: f32[1], index: 2, kind: output, shape index: {}]
  %s3 = sld [smem:[#allocation0]]
  $region57: #{tpu_custom_call.1} parent=0
    _
  %s5 = ssub.s32 1, %s3
  %s6 = scalar_select 0, %s5, %s3
  $region1: #{tpu_custom_call.1} parent=0
    #allocation3 [shape = 'u8[32768]{0}', space=vmem, size = 0x8000, scoped, tag = 'input window, operand 0']
    #allocation4 [shape = 's32[2]{0}', space=sflag, size = 0x8, scoped, tag = 'scoped memory for tpu_custom_call.1']
    #allocation5 [shape = 's32[2]{0}', space=sflag, size = 0x8, scoped, tag = 'scoped memory for tpu_custom_call.1']
    #allocation6 [shape = 'u8[8192]{0}', space=vmem, size = 0x2000, scoped, tag = 'input window, operand 1']
    #allocation7 [shape = 's32[2]{0}', space=sflag, size = 0x8, scoped, tag = 'scoped memory for tpu_custom_call.1']
    #allocation8 [shape = 'u8[512]{0}', space=smem, size = 0x200, scoped, tag = 'output window, operand 0, single buffered']
    %7 = vsyncpa [#allocation4], 0
    %s8 = scalar_lea.sflag [#allocation4], 1
    %9 = vsyncpa %s8, 0
    %10 = vsyncpa [#allocation7], 0
    %s11 = scalar_lea.sflag [#allocation7], 1
    %12 = vsyncpa %s11, 0
    %13 = vsyncpa [#allocation5], 0
    loop: start=0, step=1, limit=4
    $region2: #{tpu_custom_call.1} parent=1 // loop_pre_header
      _
    $region3: #{tpu_custom_call.1} parent=1 // loop_header
      %s15 = sphi 0, %s19
      %p16 = scmp.ge.s32.totalorder %s15, 4
      %s22 = sphi 0, %s34
      %s23 = sphi 0, %s30
      %s24 = sphi 0, %s22
      %s25 = sphi 0, %s23
      %s26 = sphi 0, %s24
      %s27 = sphi 0, %s25
      %s39 = sphi 0, %s41
      %s42 = sphi 0, %s39
      %s43 = sphi 0, %s42
      %s59 = sphi 0, %s43
      %s67 = sphi 0, %s69
      %s70 = sphi 0, %s67
      %s71 = sphi 0, %s70
      %s87 = sphi 0, %s71
      %s91 = sphi 0, %s91
      %s93 = sphi 0, %s91
      %s94 = sphi 0, %s93
      %s108 = sphi 0, %s94
    $region4: #{tpu_custom_call.1} parent=1 // loop_header_branch
      %18 = sbr.rel (%p16) target = $region8
    $region5: #{tpu_custom_call.1} parent=1 // loop_body
      %s20 = ssub.s32 %s15, 1
      %s21 = ssub.s32 %s15, 2
      %s28 = sadd.s32 1, %s23
      %p29 = scmp.ge.s32.totalorder %s28, 1
      %s30 = scalar_select %p29, 0, %s28
      %s31 = sadd.s32 1, %s22
      %s32 = scalar_select %p29, %s31, %s22
      %p33 = scmp.ge.s32.totalorder %s32, 2
      %s34 = scalar_select %p33, 0, %s32
      %s35 = ssub.s32 %s22, %s34
      %s36 = ssub.s32 %s23, %s30
      %s37 = sor.u32 %s35, %s36
      %p38 = scmp.eq.s32.totalorder %s37, 0
      %s40 = sadd.s32 %s39, 1
      %s41 = scalar_select %p38, %s39, %s40
      %p44 = pneg %p38
      %p45 = scmp.eq.s32.totalorder %s15, 1
      %p46 = por %p44, %p45
      %p47 = scmp.ne.s32.totalorder %s39, %s42
      %p48 = scmp.eq.s32.totalorder %s15, 0
      %p49 = por %p47, %p48
      %p50 = scmp.ne.s32.totalorder %s39, %s42
      %p51 = scmp.eq.s32.totalorder %s20, 1
      %p52 = por %p50, %p51
      %p53 = scmp.ne.s32.totalorder %s42, %s43
      %p54 = scmp.eq.s32.totalorder %s20, 0
      %p55 = por %p53, %p54
      %p56 = scmp.ne.s32.totalorder %s42, %s43
      %p57 = scmp.eq.s32.totalorder %s21, 1
      %p58 = por %p56, %p57
      %p60 = scmp.ne.s32.totalorder %s43, %s59
      %p61 = scmp.eq.s32.totalorder %s21, 0
      %p62 = por %p60, %p61
      %s63 = ssub.s32 %s22, %s34
      %s64 = ssub.s32 %s23, %s30
      %s65 = sor.u32 %s63, %s64
      %p66 = scmp.eq.s32.totalorder %s65, 0
      %s68 = sadd.s32 %s67, 1
      %s69 = scalar_select %p66, %s67, %s68
      %p72 = pneg %p66
      %p73 = scmp.eq.s32.totalorder %s15, 1
      %p74 = por %p72, %p73
      %p75 = scmp.ne.s32.totalorder %s67, %s70
      %p76 = scmp.eq.s32.totalorder %s15, 0
      %p77 = por %p75, %p76
      %p78 = scmp.ne.s32.totalorder %s67, %s70
      %p79 = scmp.eq.s32.totalorder %s20, 1
      %p80 = por %p78, %p79
      %p81 = scmp.ne.s32.totalorder %s70, %s71
      %p82 = scmp.eq.s32.totalorder %s20, 0
      %p83 = por %p81, %p82
      %p84 = scmp.ne.s32.totalorder %s70, %s71
      %p85 = scmp.eq.s32.totalorder %s21, 1
      %p86 = por %p84, %p85
      %p88 = scmp.ne.s32.totalorder %s71, %s87
      %p89 = scmp.eq.s32.totalorder %s21, 0
      %p90 = por %p88, %p89
      %s92 = sadd.s32 %s91, 1
      %p95 = scmp.eq.s32.totalorder %s15, 1
      %p96 = scmp.ne.s32.totalorder %s91, %s93
      %p97 = scmp.eq.s32.totalorder %s15, 0
      %p98 = por %p96, %p97
      %p99 = scmp.ne.s32.totalorder %s91, %s93
      %p100 = scmp.eq.s32.totalorder %s20, 1
      %p101 = por %p99, %p100
      %p102 = scmp.ne.s32.totalorder %s93, %s94
      %p103 = scmp.eq.s32.totalorder %s20, 0
      %p104 = por %p102, %p103
      %p105 = scmp.ne.s32.totalorder %s93, %s94
      %p106 = scmp.eq.s32.totalorder %s21, 1
      %p107 = por %p105, %p106
      %p109 = scmp.ne.s32.totalorder %s94, %s108
      %p110 = scmp.eq.s32.totalorder %s21, 0
      %p111 = por %p109, %p110
      %p112 = scmp.le.s32.totalorder 1, %s15
      %p113 = scmp.lt.s32.totalorder %s15, 3
      %p114 = pnand %p112, %p113
      %p115 = pneg %p114
      // Predicated region
      $region9: #{tpu_custom_call.1} parent=5 // pred_check
        _
      $region10: #{tpu_custom_call.1} parent=5 // pred_check_branch
        %117 = sbr.rel (%p114) target = $region12
      $region11: #{tpu_custom_call.1} parent=5 // pred_region
        %s118 = ssub.s32 %s15, 1
      $region12: #{tpu_custom_call.1} parent=5 // pred_fallthru
        _
      %p119 = scmp.lt.s32.totalorder %s15, 2
      // Predicated region
      $region13: #{tpu_custom_call.1} parent=5 // pred_check
        %p120 = pneg %p119
      $region14: #{tpu_custom_call.1} parent=5 // pred_check_branch
        %122 = sbr.rel (%p120) target = $region16
      $region15: #{tpu_custom_call.1} parent=5 // pred_region
        // Predicated region
        $region17: #{tpu_custom_call.1} parent=15 // pred_check
          %p123 = pneg %p49
        $region18: #{tpu_custom_call.1} parent=15 // pred_check_branch
          %125 = sbr.rel (%p123) target = $region20
        $region19: #{tpu_custom_call.1} parent=15 // pred_region
          %s126 = sand.u32 %s39, 1
          %s127 = scalar_lea.sflag [#allocation4], %s126
          %s128 = sand.u32 %s39, 1
          %s129 = smul.addr %s128, 32
          %s130 = scalar_lea.vmem [#allocation3], %s129
          %s132 = ssub.s32 512, 512
          %133 = vsyncadd %s127, %s132
          %s134 = smul.addr %s22, 4
          %s135 = sadd.s32 %s23, %s134
          %s136 = smul.addr %s135, 128
          %s137 = scalar_lea.hbm %s0, %s136
          %s138 = sshll.u32 %s130, 4
          %s139 = int_to_ptr.vmem [resolvable:$true] %s138
          %144 = dma.hbm_to_vmem [thread:$0]  %s137, 512, %s139, %s127, 128, 128, 8
        $region20: #{tpu_custom_call.1} parent=15 // pred_fallthru
          _
        // Predicated region
        $region21: #{tpu_custom_call.1} parent=15 // pred_check
          %p145 = pneg %p77
        $region22: #{tpu_custom_call.1} parent=15 // pred_check_branch
          %147 = sbr.rel (%p145) target = $region24
        $region23: #{tpu_custom_call.1} parent=15 // pred_region
          %s148 = sand.u32 %s67, 1
          %s149 = scalar_lea.sflag [#allocation7], %s148
          %s150 = sand.u32 %s67, 1
          %s151 = smul.addr %s150, 8
          %s152 = scalar_lea.vmem [#allocation6], %s151
          %s154 = ssub.s32 128, 128
          %155 = vsyncadd %s149, %s154
          %s156 = sadd.s32 %s23, %s22
          %s157 = smul.addr %s156, 128
          %s158 = scalar_lea.hbm %s1, %s157
          %s160 = sshll.u32 %s152, 4
          %s161 = int_to_ptr.vmem [resolvable:$true] %s160
          %163 = dma.hbm_to_vmem [thread:$0]  %s158, 128, %s161, %s149
        $region24: #{tpu_custom_call.1} parent=15 // pred_fallthru
          _
      $region16: #{tpu_custom_call.1} parent=5 // pred_fallthru
        _
      %p164 = scmp.le.s32.totalorder 1, %s15
      %p165 = scmp.lt.s32.totalorder %s15, 3
      %p166 = pnand %p164, %p165
      %p167 = pneg %p166
      // Predicated region
      $region25: #{tpu_custom_call.1} parent=5 // pred_check
        _
      $region26: #{tpu_custom_call.1} parent=5 // pred_check_branch
        %169 = sbr.rel (%p166) target = $region28
      $region27: #{tpu_custom_call.1} parent=5 // pred_region
        %s170 = ssub.s32 %s15, 1
        %s171 = sand.u32 %s42, 1
        %s172 = scalar_lea.sflag [#allocation4], %s171
        %s173 = sand.u32 %s42, 1
        %s174 = smul.addr %s173, 32
        %s175 = scalar_lea.vmem [#allocation3], %s174
        // Predicated region
        $region29: #{tpu_custom_call.1} parent=27 // pred_check
          %p176 = pneg %p55
        $region30: #{tpu_custom_call.1} parent=27 // pred_check_branch
          %178 = sbr.rel (%p176) target = $region32
        $region31: #{tpu_custom_call.1} parent=27 // pred_region
          %179 = dma.done %s172, 512
        $region32: #{tpu_custom_call.1} parent=27 // pred_fallthru
          _
        %s180 = sand.u32 %s70, 1
        %s181 = scalar_lea.sflag [#allocation7], %s180
        %s182 = sand.u32 %s70, 1
        %s183 = smul.addr %s182, 8
        %s184 = scalar_lea.vmem [#allocation6], %s183
        // Predicated region
        $region33: #{tpu_custom_call.1} parent=27 // pred_check
          %p185 = pneg %p83
        $region34: #{tpu_custom_call.1} parent=27 // pred_check_branch
          %187 = sbr.rel (%p185) target = $region36
        $region35: #{tpu_custom_call.1} parent=27 // pred_region
          %188 = dma.done %s181, 128
        $region36: #{tpu_custom_call.1} parent=27 // pred_fallthru
          _
        %s189 = sand.u32 %s42, 1
        %s190 = scalar_lea.sflag [#allocation4], %s189
        %s191 = sand.u32 %s42, 1
        %s192 = smul.addr %s191, 32
        %s193 = scalar_lea.vmem [#allocation3], %s192
        %p194 = pneg %p55
        %p195 = pneg %p52
        %s196 = sand.u32 %s70, 1
        %s197 = scalar_lea.sflag [#allocation7], %s196
        %s198 = sand.u32 %s70, 1
        %s199 = smul.addr %s198, 8
        %s200 = scalar_lea.vmem [#allocation6], %s199
        %p201 = pneg %p83
        %p202 = pneg %p80
        %p203 = pneg %p104
        %p204 = pneg %p101
        %p205 = scmp.eq.s32.totalorder %s24, 0
        %p206 = scmp.eq.s32.totalorder %s25, 0
        %p207 = pnand %p205, %p206
        %p208 = pneg %p207
        // Predicated region
        $region37: #{tpu_custom_call.1} parent=27 // pred_check
          _
        $region38: #{tpu_custom_call.1} parent=27 // pred_check_branch
          %210 = sbr.rel (%p207) target = $region40
        $region39: #{tpu_custom_call.1} parent=27 // pred_region
          %211 = vst [vmem:[#allocation2] sm:$0xff] 0.0
          %212 = vst [vmem:[#allocation2 + $0x8] sm:$0xff] 0.0
          %213 = vst [vmem:[#allocation2 + $0x10] sm:$0xff] 0.0
          %214 = vst [vmem:[#allocation2 + $0x18] sm:$0xff] 0.0
          %215 = vst [vmem:[#allocation2 + $0x20] sm:$0xff] 0.0
        $region40: #{tpu_custom_call.1} parent=27 // pred_fallthru
          _
        %v216 = vlaneseq
        %v217 = vshrl.u32 %v216, 7
        %v218 = vlaneseq
        %v219 = vand.u32 %v218, 127
        %v220 = vmul.u32 %v217, 128
        %v221 = vadd.s32 %v220, %v219
        %v222 = vld [vmem:[%s184] sm:$0xff]
        %v223 = vld [vmem:[%s175] sm:$0xff]
        %s224 = scalar_lea.vmem %s175, 8 [#allocation3]
        %v225 = vld [vmem:[%s224] sm:$0xff]
        %s226 = scalar_lea.vmem %s175, 16 [#allocation3]
        %v227 = vld [vmem:[%s226] sm:$0xff]
        %s228 = scalar_lea.vmem %s175, 24 [#allocation3]
        %v229 = vld [vmem:[%s228] sm:$0xff]
        %v230 = vmax.f32 %v223, %v225
        %v231 = vmax.f32 %v230, %v227
        %v232 = vmax.f32 %v231, %v229
        %v233 = vsub.f32 %v223, %v232
        %v234 = vmul.f32 %v233, 1.442695
        %v235 = vpow.pop %v234
        %vm236 = vcmp.eq.s32.totalorder %v222, 0
        %v237 = vsel %vm236, 1, 0
        %v238 = vcvt.s32.f32 %v237
        %v239 = vmul.f32 %v233, %v238
        %v240 = vsub.f32 %v225, %v232
        %v241 = vmul.f32 %v240, 1.442695
        %v242 = vpow.pop %v241
        %v243 = vadd.f32 %v235, %v242
        %vm244 = vcmp.eq.s32.totalorder %v222, 1
        %v245 = vsel %vm244, 1, 0
        %v246 = vcvt.s32.f32 %v245
        %v247 = vmul.f32 %v240, %v246
        %v248 = vadd.f32 %v239, %v247
        %v249 = vsub.f32 %v227, %v232
        %v250 = vmul.f32 %v249, 1.442695
        %v251 = vpow.pop %v250
        %v252 = vadd.f32 %v243, %v251
        %vm253 = vcmp.eq.s32.totalorder %v222, 2
        %v254 = vsel %vm253, 1, 0
        %v255 = vcvt.s32.f32 %v254
        %v256 = vmul.f32 %v249, %v255
        %v257 = vadd.f32 %v248, %v256
        %v258 = vsub.f32 %v229, %v232
        %v259 = vmul.f32 %v258, 1.442695
        %v260 = vpow.pop %v259
        %v261 = vadd.f32 %v252, %v260
        %vm262 = vcmp.eq.s32.totalorder %v222, 3
        %v263 = vsel %vm262, 1, 0
        %v264 = vcvt.s32.f32 %v263
        %v265 = vmul.f32 %v258, %v264
        %v266 = vadd.f32 %v257, %v265
        %v267 = vlog2.pop %v261
        %v268 = vmul.f32 %v267, 0.6931472
        %v269 = vsub.f32 %v268, %v266
        %v270 = vrcp.pop %v261
        %v271 = vmul.f32 %v242, %v270
        %v272 = vcvt.s32.f32 %v222
        %s273 = smul.u32 %s25, 1024
        %v274 = vstv %s273
        %v275 = vadd.s32 %v274, %v221
        %vm276 = vcmp.lt.s32.totalorder %v275, 256
        %v277 = vsel %vm276, 1, 0
        %v278 = vcvt.s32.f32 %v277
        %v279 = vmul.f32 %v278, %v269
        %v280 = vadd.f32 %v279, 0.0
        %v281 = vadd.f32 %v278, 0.0
        %v282 = vmul.f32 %v271, %v272
        %v283 = vmul.f32 %v278, %v282
        %v284 = vadd.f32 %v283, 0.0
        %v285 = vmul.f32 %v278, %v271
        %v286 = vadd.f32 %v285, 0.0
        %v287 = vmul.f32 %v278, %v272
        %v288 = vadd.f32 %v287, 0.0
        %v289 = vld [vmem:[#allocation2] sm:$0xff]
        %v290 = vadd.f32 %v289, %v280
        %291 = vst [vmem:[#allocation2] sm:$0xff] %v290
        %s292 = scalar_lea.vmem [#allocation2], 8
        %v293 = vld [vmem:[%s292] sm:$0xff]
        %v294 = vadd.f32 %v293, %v281
        %295 = vst [vmem:[%s292] sm:$0xff] %v294
        %s296 = scalar_lea.vmem [#allocation2], 16
        %v297 = vld [vmem:[%s296] sm:$0xff]
        %v298 = vadd.f32 %v297, %v284
        %299 = vst [vmem:[%s296] sm:$0xff] %v298
        %s300 = scalar_lea.vmem [#allocation2], 24
        %v301 = vld [vmem:[%s300] sm:$0xff]
        %v302 = vadd.f32 %v301, %v286
        %303 = vst [vmem:[%s300] sm:$0xff] %v302
        %s304 = scalar_lea.vmem [#allocation2], 32
        %v305 = vld [vmem:[%s304] sm:$0xff]
        %v306 = vadd.f32 %v305, %v288
        %307 = vst [vmem:[%s304] sm:$0xff] %v306
        %p308 = scmp.eq.s32.totalorder %s24, 1
        %p309 = pnand %p308, %p206
        %p310 = pneg %p309
        // Predicated region
        $region41: #{tpu_custom_call.1} parent=27 // pred_check
          _
        $region42: #{tpu_custom_call.1} parent=27 // pred_check_branch
          %312 = sbr.rel (%p309) target = $region44
        $region43: #{tpu_custom_call.1} parent=27 // pred_region
          %v313 = vld [vmem:[#allocation2] sm:$0xff]
          %314 = vadd.xlane.f32.xlu0 %v313
          %v315 = vpop.xlane.xlu0 %314
          %v316 = vrot.slane %v315, 4
          %v317 = vadd.f32 %v315, %v316
          %v318 = vrot.slane %v317, 2
          %v319 = vadd.f32 %v317, %v318
          %v320 = vrot.slane %v319, 1
          %v321 = vadd.f32 %v319, %v320
          %s322 = vtos %v321
          %v323 = vld [vmem:[%s292] sm:$0xff]
          %324 = vadd.xlane.f32.xlu0 %v323
          %v325 = vpop.xlane.xlu0 %324
          %v326 = vrot.slane %v325, 4
          %v327 = vadd.f32 %v325, %v326
          %v328 = vrot.slane %v327, 2
          %v329 = vadd.f32 %v327, %v328
          %v330 = vrot.slane %v329, 1
          %v331 = vadd.f32 %v329, %v330
          %s332 = vtos %v331
          %v333 = vld [vmem:[%s296] sm:$0xff]
          %334 = vadd.xlane.f32.xlu0 %v333
          %v335 = vpop.xlane.xlu0 %334
          %v336 = vrot.slane %v335, 4
          %v337 = vadd.f32 %v335, %v336
          %v338 = vrot.slane %v337, 2
          %v339 = vadd.f32 %v337, %v338
          %v340 = vrot.slane %v339, 1
          %v341 = vadd.f32 %v339, %v340
          %s342 = vtos %v341
          %v343 = vld [vmem:[%s300] sm:$0xff]
          %344 = vadd.xlane.f32.xlu0 %v343
          %v345 = vpop.xlane.xlu0 %344
          %v346 = vrot.slane %v345, 4
          %v347 = vadd.f32 %v345, %v346
          %v348 = vrot.slane %v347, 2
          %v349 = vadd.f32 %v347, %v348
          %v350 = vrot.slane %v349, 1
          %v351 = vadd.f32 %v349, %v350
          %s352 = vtos %v351
          %v353 = vld [vmem:[%s304] sm:$0xff]
          %354 = vadd.xlane.f32.xlu0 %v353
          %v355 = vpop.xlane.xlu0 %354
          %v356 = vrot.slane %v355, 4
          %v357 = vadd.f32 %v355, %v356
          %v358 = vrot.slane %v357, 2
          %v359 = vadd.f32 %v357, %v358
          %v360 = vrot.slane %v359, 1
          %v361 = vadd.f32 %v359, %v360
          %s362 = vtos %v361
          %v363 = vstv %s332
          %v364 = vrcp.pop %v363
          %s365 = vtos %v364
          %s366 = smul.f32 %s322, %s365
          %s367 = smul.f32 %s342, 2.0
          %s368 = sadd.f32 %s367, 1.0
          %s369 = sadd.f32 %s352, %s362
          %s370 = sadd.f32 %s369, 1.0
          %v371 = vstv %s370
          %v372 = vrcp.pop %v371
          %s373 = vtos %v372
          %s374 = smul.f32 %s368, %s373
          %s375 = ssub.f32 1.0, %s374
          %s376 = sadd.f32 %s366, %s375
          %s377 = scalar_lea.smem [#allocation8], 0
          %378 = sst [smem:[%s377]] %s376
        $region44: #{tpu_custom_call.1} parent=27 // pred_fallthru
          _
        // Predicated region
        $region45: #{tpu_custom_call.1} parent=27 // pred_check
          %p379 = pneg %p101
        $region46: #{tpu_custom_call.1} parent=27 // pred_check_branch
          %381 = sbr.rel (%p379) target = $region48
        $region47: #{tpu_custom_call.1} parent=27 // pred_region
          %s383 = ssub.s32 16, 16
          %384 = vsyncadd [#allocation5], %s383
          %387 = dma.smem_to_hbm [#allocation8], 16, %s2, [#allocation5]
        $region48: #{tpu_custom_call.1} parent=27 // pred_fallthru
          _
        // Predicated region
        $region49: #{tpu_custom_call.1} parent=27 // pred_check
          %p388 = pneg %p101
        $region50: #{tpu_custom_call.1} parent=27 // pred_check_branch
          %390 = sbr.rel (%p388) target = $region52
        $region51: #{tpu_custom_call.1} parent=27 // pred_region
          %391 = dma.done [#allocation5], 16
        $region52: #{tpu_custom_call.1} parent=27 // pred_fallthru
          _
        %392 = sfence
      $region28: #{tpu_custom_call.1} parent=5 // pred_fallthru
        _
      %p393 = scmp.le.s32.totalorder 2, %s15
      // Predicated region
      $region53: #{tpu_custom_call.1} parent=5 // pred_check
        %p394 = pneg %p393
      $region54: #{tpu_custom_call.1} parent=5 // pred_check_branch
        %396 = sbr.rel (%p394) target = $region56
      $region55: #{tpu_custom_call.1} parent=5 // pred_region
        %s397 = ssub.s32 %s15, 2
      $region56: #{tpu_custom_call.1} parent=5 // pred_fallthru
        _
    $region6: #{tpu_custom_call.1} parent=1 // loop_footer
      %s19 = sadd.s32 1, %s15
    $region7: #{tpu_custom_call.1} parent=1 // loop_footer_branch
      %14 = sbr.rel target = $region3
    $region8: #{tpu_custom_call.1} parent=1 // loop_exit
      _
    %398 = vsyncpa [#allocation4], 1
    %s399 = scalar_lea.sflag [#allocation4], 1
    %400 = vsyncpa %s399, 1
    %401 = vsyncpa [#allocation7], 1
    %s402 = scalar_lea.sflag [#allocation7], 1
    %403 = vsyncpa %s402, 1
    %404 = vsyncpa [#allocation5], 1
    %s405 = scalar_lea.sflag [#allocation5], 1
    %406 = vsyncpa %s405, 1

</llo_original>
